<compile_context>
chip_gen: v7x
topology: tpu7x:2x2x1
jax: 0.10.0
libtpu: 0.0.40
codegen_flags: <defaults>
</compile_context>

<pallas_src>
import numpy as np
import jax
import jax.numpy as jnp
from jax import lax
from jax.experimental import pallas as pl
from jax.experimental.pallas import tpu as pltpu

_EPS = 1e-30  # clamp on squared norms; no-op for well-conditioned rows.


# --------------------------------------------------------------------------- #
# Kernel: one grid step processes TB batch rows of sam_logits.
# --------------------------------------------------------------------------- #
def _make_kernel(do_pos, do_neg):
    def kernel(mask_ref, x_ref, y_ref, o_pos_ref, o_neg_ref):
        # y_ref   : (TB, N, Mp)  unsup_corrs rows (column axis N, features Mp)
        # mask_ref: (TB, N, 1)   is_pos mask as {0,1} float32
        # x_ref   : (TB, Mp)     pos_corrs rows
        y = y_ref[...].astype(jnp.float32)                         # (TB, N, Mp)
        ysq = jnp.sum(y * y, axis=-1, keepdims=True)               # (TB, N, 1)  lane reduce
        u = y * lax.rsqrt(jnp.maximum(ysq, _EPS))                  # (TB, N, Mp) EUP + bcast
        m = mask_ref[...]                                          # (TB, N, 1)

        if do_pos:
            x = x_ref[...].astype(jnp.float32)                     # (TB, Mp)
            xsq = jnp.sum(x * x, axis=-1, keepdims=True)           # (TB, 1)
            ux = x * lax.rsqrt(jnp.maximum(xsq, _EPS))             # (TB, Mp)
            c_pos = jnp.sum(m * u, axis=1)                         # (TB, Mp)  sum over pos cols
            # Per-row, per-lane partials of <ux_b, c_pos_b>; summed host-side.
            o_pos_ref[...] = ux * c_pos                            # (TB, Mp) dense store
        else:
            o_pos_ref[...] = jnp.zeros_like(o_pos_ref)

        if do_neg:
            c_neg = jnp.sum((1.0 - m) * u, axis=1)                 # (TB, Mp)  sum over neg cols
            # Per-row, per-lane partials of ||c_neg_b||^2; summed host-side.
            o_neg_ref[...] = c_neg * c_neg                         # (TB, Mp) dense store
        else:
            o_neg_ref[...] = jnp.zeros_like(o_neg_ref)

    return kernel


# --------------------------------------------------------------------------- #
# Per-generation tiling helpers.
# --------------------------------------------------------------------------- #
def _vmem_capacity_bytes():
    try:
        return int(pltpu.get_tpu_info().vmem_capacity_bytes)
    except Exception:
        return 64 << 20  # conservative default (v7x per-TensorCore physical VMEM)


def _pick_row_tile(n_rows, n_cols, mp, tile_budget_bytes):
    """Largest TB that (a) divides n_rows, (b) is a multiple of 8 or == n_rows
    (8,128 layout rule for the 2-D blocks), (c) fits the VMEM tile budget, and
    (d) preferably leaves >= 2 grid steps so the 'parallel' axis can shard."""
    # per-row footprint: y block double-buffered + f32 temps (u, masked u) + small
    per_row = 4 * (4 * n_cols * mp + 2 * mp + 2 * n_cols)
    cap = max(1, tile_budget_bytes // max(per_row, 1))
    allowed = [d for d in range(1, n_rows + 1)
               if n_rows % d == 0 and (d % 8 == 0 or d == n_rows)]
    pref = [d for d in allowed if d <= cap and d <= max(1, n_rows // 2)]
    if pref:
        return max(pref)
    fit = [d for d in allowed if d <= cap]
    if fit:
        return max(fit)
    return min(allowed)


# --------------------------------------------------------------------------- #
# Wrapper replicating SpatialAlignLoss.forward
# --------------------------------------------------------------------------- #
def spatial_align_loss(sam_logits, labels, mode="pos"):
    """Pallas-backed equivalent of SpatialAlignLoss.forward.

    sam_logits: (N+1, N, M) array;  labels: length-N host array (trace-time
    constant, same restriction as the PyTorch boolean-mask view(N, -1, M))."""
    labels = np.asarray(labels)
    sam_logits = jnp.asarray(sam_logits)
    np1, ncols, M = sam_logits.shape
    N = np1 - 1
    assert ncols == N and labels.shape[0] == N

    is_pos = labels[None, :] == labels[:, None]                    # (N, N) numpy bool
    counts = is_pos.sum(axis=1)
    assert np.all(counts == counts[0]), \
        "SpatialAlignLoss requires an equal positive count per sample"
    P = int(counts[0])
    Q = N - P

    do_pos = "pos" in mode
    do_neg = ("neg" in mode) and Q > 0
    # TODO(synk): when 'neg' in mode and Q == 0 the PyTorch reference takes the
    # mean of an empty tensor (NaN); that degenerate case is skipped here.
    if not (do_pos or do_neg):
        return jnp.float32(0.0)

    # Lane-dense layout: zero-pad M to a multiple of 128 (exact for cosine).
    Mp = max(128, ((M + 127) // 128) * 128)
    if Mp != M:
        sam_logits = jnp.pad(sam_logits, ((0, 0), (0, 0), (0, Mp - M)))

    y_full = sam_logits                          # (N+1, N, Mp); last row never DMA'd
    pos_x = sam_logits[-1]                       # (N, Mp)  tiny slice
    mask = jnp.asarray(is_pos.astype(np.float32)).reshape(N, N, 1)

    vmem_cap = _vmem_capacity_bytes()
    tb = _pick_row_tile(N, N, Mp, tile_budget_bytes=vmem_cap // 4)
    grid = N // tb

    o_pos, o_neg = pl.pallas_call(
        _make_kernel(do_pos, do_neg),
        out_shape=(jax.ShapeDtypeStruct((N, Mp), jnp.float32),
                   jax.ShapeDtypeStruct((N, Mp), jnp.float32)),
        grid_spec=pltpu.PrefetchScalarGridSpec(
            num_scalar_prefetch=0,
            grid=(grid,),
            in_specs=[
                pl.BlockSpec((tb, N, 1), lambda g: (g, 0, 0)),     # is_pos mask
                pl.BlockSpec((tb, Mp), lambda g: (g, 0)),          # pos_corrs rows
                pl.BlockSpec((tb, N, Mp), lambda g: (g, 0, 0)),    # unsup_corrs rows
            ],
            out_specs=[
                pl.BlockSpec((tb, Mp), lambda g: (g, 0)),
                pl.BlockSpec((tb, Mp), lambda g: (g, 0)),
            ],
        ),
        compiler_params=pltpu.CompilerParams(
            dimension_semantics=("parallel",),       # shard row tiles across TCs (v7x)
            vmem_limit_bytes=vmem_cap // 2,          # raise v5e's 16 MiB scoped default
        ),
    )(mask, pos_x, y_full)

    # Tiny fused scalar epilogue.
    loss = jnp.float32(0.0)
    if do_pos:
        loss = loss + (jnp.float32(1.0) - jnp.sum(o_pos) / jnp.float32(N * P))
    if do_neg:
        loss = loss + (jnp.float32(1.0) - jnp.sum(o_neg) / jnp.float32(N * Q * Q))
    return loss


# --------------------------------------------------------------------------- #
# Pure-numpy reference of the PyTorch forward (sanity check only)
# --------------------------------------------------------------------------- #
def _reference_loss(sam_logits, labels, mode="pos"):
    x = np.asarray(sam_logits, dtype=np.float64)
    labels = np.asarray(labels)
    N = x.shape[0] - 1
    unsup = x[:-1]
    posx = x[-1][:, None, :]
    is_pos = labels[None, :] == labels[:, None]

    def bcd(a, b):
        up = np.einsum("bim,bjm->bij", a, b)
        na = np.sqrt((a ** 2).sum(-1))[:, :, None]
        nb = np.sqrt((b ** 2).sum(-1))[:, None, :]
        return 1.0 - up / (na * nb)

    out = 0.0
    if "pos" in mode:
        unsup_pos = np.stack([unsup[i][is_pos[i]] for i in range(N)])
        out += bcd(posx, unsup_pos).mean()
    if "neg" in mode:
        unsup_neg = np.stack([unsup[i][~is_pos[i]] for i in range(N)])
        out += bcd(unsup_neg, unsup_neg).mean()
    return out


if __name__ == "__main__":
    key = jax.random.PRNGKey(0)
    N, M = 16, 96                      # M=96 exercises the zero-pad-to-128 path
    labels = np.repeat(np.arange(4, dtype=np.int32), 4)   # 4 ids x 4 instances
    sam_logits = jax.random.normal(key, (N + 1, N, M), dtype=jnp.float32)

    # Default mode of the module.
    loss_pos = jax.block_until_ready(
        spatial_align_loss(sam_logits, labels, mode="pos"))
    np.testing.assert_allclose(
        np.asarray(loss_pos), _reference_loss(sam_logits, labels, "pos"),
        rtol=1e-4, atol=1e-5)

    # Also exercise the 'neg' branch.
    loss_both = jax.block_until_ready(
        spatial_align_loss(sam_logits, labels, mode="pos_neg"))
    np.testing.assert_allclose(
        np.asarray(loss_both), _reference_loss(sam_logits, labels, "pos_neg"),
        rtol=1e-4, atol=1e-5)

    print("KERNEL_OK")
</pallas_src>

<mosaic_0001>
module attributes {stable_mosaic.version = 11 : i64} {
  func.func @kernel(%arg0: i32, %arg1: memref<8x16x1xf32, #tpu.memory_space<vmem>>, %arg2: memref<8x128xf32, #tpu.memory_space<vmem>>, %arg3: memref<8x16x128xf32, #tpu.memory_space<vmem>>, %arg4: memref<8x128xf32, #tpu.memory_space<vmem>>, %arg5: memref<8x128xf32, #tpu.memory_space<vmem>>) attributes {dimension_semantics = [#tpu.dimension_semantics<parallel>], iteration_bounds = array<i64: 2>, scalar_prefetch = 0 : i64, scratch_operands = 0 : i64, tpu.core_type = #tpu.core_type<tc>, window_params = [{transform_indices = @transform_0, window_bounds = array<i64: 8, 16, 1>}, {transform_indices = @transform_1, window_bounds = array<i64: 8, 128>}, {transform_indices = @transform_2, window_bounds = array<i64: 8, 16, 128>}, {transform_indices = @transform_3, window_bounds = array<i64: 8, 128>}, {transform_indices = @transform_4, window_bounds = array<i64: 8, 128>}]} {
    %c0 = arith.constant 0 : index
    %c0_0 = arith.constant 0 : index
    %c0_1 = arith.constant 0 : index
    %0 = vector.load %arg3[%c0, %c0_0, %c0_1] : memref<8x16x128xf32, #tpu.memory_space<vmem>>, vector<8x16x128xf32>
    %1 = arith.mulf %0, %0 : vector<8x16x128xf32>
    %cst = arith.constant dense<0.000000e+00> : vector<8x16xf32>
    %2 = vector.multi_reduction <add>, %1, %cst [2] : vector<8x16x128xf32> to vector<8x16xf32>
    %3 = vector.shape_cast %2 : vector<8x16xf32> to vector<8x16x1xf32>
    %cst_2 = arith.constant 1.000000e-30 : f32
    %4 = vector.broadcast %cst_2 : f32 to vector<8x16x1xf32>
    %5 = arith.maximumf %3, %4 : vector<8x16x1xf32>
    %6 = math.rsqrt %5 : vector<8x16x1xf32>
    %7 = vector.broadcast %6 : vector<8x16x1xf32> to vector<8x16x128xf32>
    %8 = arith.mulf %0, %7 : vector<8x16x128xf32>
    %c0_3 = arith.constant 0 : index
    %c0_4 = arith.constant 0 : index
    %c0_5 = arith.constant 0 : index
    %9 = vector.load %arg1[%c0_3, %c0_4, %c0_5] : memref<8x16x1xf32, #tpu.memory_space<vmem>>, vector<8x16x1xf32>
    %c0_6 = arith.constant 0 : index
    %c0_7 = arith.constant 0 : index
    %10 = vector.load %arg2[%c0_6, %c0_7] : memref<8x128xf32, #tpu.memory_space<vmem>>, vector<8x128xf32>
    %11 = arith.mulf %10, %10 : vector<8x128xf32>
    %cst_8 = arith.constant dense<0.000000e+00> : vector<8xf32>
    %12 = vector.multi_reduction <add>, %11, %cst_8 [1] : vector<8x128xf32> to vector<8xf32>
    %13 = vector.shape_cast %12 : vector<8xf32> to vector<8x1xf32>
    %cst_9 = arith.constant 1.000000e-30 : f32
    %14 = vector.broadcast %cst_9 : f32 to vector<8x1xf32>
    %15 = arith.maximumf %13, %14 : vector<8x1xf32>
    %16 = math.rsqrt %15 : vector<8x1xf32>
    %17 = vector.broadcast %16 : vector<8x1xf32> to vector<8x128xf32>
    %18 = arith.mulf %10, %17 : vector<8x128xf32>
    %19 = vector.broadcast %9 : vector<8x16x1xf32> to vector<8x16x128xf32>
    %20 = arith.mulf %19, %8 : vector<8x16x128xf32>
    %cst_10 = arith.constant dense<0.000000e+00> : vector<8x128xf32>
    %21 = vector.multi_reduction <add>, %20, %cst_10 [1] : vector<8x16x128xf32> to vector<8x128xf32>
    %22 = arith.mulf %18, %21 : vector<8x128xf32>
    %c0_11 = arith.constant 0 : index
    %c0_12 = arith.constant 0 : index
    %23 = vector.load %arg4[%c0_11, %c0_12] : memref<8x128xf32, #tpu.memory_space<vmem>>, vector<8x128xf32>
    tpu.vector_store %arg4[%c0_11, %c0_12], %22 {strides = array<i32>} : memref<8x128xf32, #tpu.memory_space<vmem>>, vector<8x128xf32>,
    %cst_13 = arith.constant 0.000000e+00 : f32
    %24 = vector.broadcast %cst_13 : f32 to vector<8x128xf32>
    %c0_14 = arith.constant 0 : index
    %c0_15 = arith.constant 0 : index
    %25 = vector.load %arg5[%c0_14, %c0_15] : memref<8x128xf32, #tpu.memory_space<vmem>>, vector<8x128xf32>
    tpu.vector_store %arg5[%c0_14, %c0_15], %24 {strides = array<i32>} : memref<8x128xf32, #tpu.memory_space<vmem>>, vector<8x128xf32>,
    return
  }
  func.func @transform_0(%arg0: i32) -> (i32, i32, i32) {
    %c0_i32 = arith.constant 0 : i32
    %c0_i32_0 = arith.constant 0 : i32
    %c0_i32_1 = arith.constant 0 : i32
    return %arg0, %c0_i32, %c0_i32_0 : i32, i32, i32
  }
  func.func @transform_1(%arg0: i32) -> (i32, i32) {
    %c0_i32 = arith.constant 0 : i32
    %c0_i32_0 = arith.constant 0 : i32
    return %arg0, %c0_i32 : i32, i32
  }
  func.func @transform_2(%arg0: i32) -> (i32, i32, i32) {
    %c0_i32 = arith.constant 0 : i32
    %c0_i32_0 = arith.constant 0 : i32
    %c0_i32_1 = arith.constant 0 : i32
    return %arg0, %c0_i32, %c0_i32_0 : i32, i32, i32
  }
  func.func @transform_3(%arg0: i32) -> (i32, i32) {
    %c0_i32 = arith.constant 0 : i32
    %c0_i32_0 = arith.constant 0 : i32
    return %arg0, %c0_i32 : i32, i32
  }
  func.func @transform_4(%arg0: i32) -> (i32, i32) {
    %c0_i32 = arith.constant 0 : i32
    %c0_i32_0 = arith.constant 0 : i32
    return %arg0, %c0_i32 : i32, i32
  }
}

</mosaic_0001>

<llo_original>
// kernel: tpu_custom_call.1
$region0: #{tpu_custom_call.1}
  #allocation0 [shape = 'u32[]', space=smem, size = 0x4, offset = 0x4, fixed_abs, tag = 'smem constant byte address 0x4 - core index']
  #allocation1 [shape = 'u32[144,128]{1,0:T(1,128)}', space=vmem, size = 0x12000, scoped, tag = 'internal scratch']
  %s0 = inlined_call_operand.vmem [shape: f32[16,16,1], index: 0, kind: input, shape index: {}]
  %s1 = inlined_call_operand.hbm [shape: f32[16,128], index: 1, kind: input, shape index: {}]
  %s2 = inlined_call_operand.vmem [shape: f32[17,16,128], index: 2, kind: input, shape index: {}]
  %s3 = inlined_call_operand.hbm [shape: f32[16,128], index: 3, kind: output, shape index: {0}]
  %s4 = inlined_call_operand.hbm [shape: f32[16,128], index: 4, kind: output, shape index: {1}]
  %5 = xla_tuple %s3, %s4
  %s6 = sld [smem:[#allocation0]]
  $region57: #{tpu_custom_call.1} parent=0
    _
  %s8 = ssub.s32 1, %s6
  %s9 = scalar_select 0, %s8, %s6
  $region1: #{tpu_custom_call.1} parent=0
    #allocation2 [shape = 'u8[8192]{0}', space=vmem, size = 0x2000, scoped, tag = 'input window, operand 1']
    #allocation3 [shape = 's32[2]{0}', space=sflag, size = 0x8, scoped, tag = 'scoped memory for tpu_custom_call.1']
    #allocation4 [shape = 's32[2]{0}', space=sflag, size = 0x8, scoped, tag = 'scoped memory for tpu_custom_call.1']
    #allocation5 [shape = 'u8[8192]{0}', space=vmem, size = 0x2000, scoped, tag = 'output window, operand 0']
    #allocation6 [shape = 'u8[8192]{0}', space=vmem, size = 0x2000, scoped, tag = 'output window, operand 1']
    #allocation7 [shape = 's32[2]{0}', space=sflag, size = 0x8, scoped, tag = 'scoped memory for tpu_custom_call.1']
    %10 = vsyncpa [#allocation3], 0
    %s11 = scalar_lea.sflag [#allocation3], 1
    %12 = vsyncpa %s11, 0
    %13 = vsyncpa [#allocation4], 0
    %s14 = scalar_lea.sflag [#allocation4], 1
    %15 = vsyncpa %s14, 0
    %16 = vsyncpa [#allocation7], 0
    %s17 = scalar_lea.sflag [#allocation7], 1
    %18 = vsyncpa %s17, 0
    loop: start=0, step=1, limit=4
    $region2: #{tpu_custom_call.1} parent=1 // loop_pre_header
      _
    $region3: #{tpu_custom_call.1} parent=1 // loop_header
      %s20 = sphi 0, %s24
      %p21 = scmp.ge.s32.totalorder %s20, 4
      %s30 = sphi 0, %s32
      %s33 = sphi 0, %s30
      %s34 = sphi 0, %s33
      %s50 = sphi 0, %s34
      %s56 = sphi 0, %s58
      %s59 = sphi 0, %s56
      %s60 = sphi 0, %s59
      %s76 = sphi 0, %s60
      %s82 = sphi 0, %s84
      %s85 = sphi 0, %s82
      %s86 = sphi 0, %s85
      %s102 = sphi 0, %s86
      %s108 = sphi 0, %s110
      %s111 = sphi 0, %s108
      %s112 = sphi 0, %s111
      %s128 = sphi 0, %s112
      %s134 = sphi 0, %s136
      %s137 = sphi 0, %s134
      %s138 = sphi 0, %s137
      %s154 = sphi 0, %s138
    $region4: #{tpu_custom_call.1} parent=1 // loop_header_branch
      %23 = sbr.rel (%p21) target = $region8
    $region5: #{tpu_custom_call.1} parent=1 // loop_body
      %s25 = ssub.s32 %s20, 1
      %s26 = ssub.s32 %s20, 2
      %s27 = sadd.s32 %s20, 1
      %s28 = ssub.s32 %s20, %s27
      %p29 = scmp.eq.s32.totalorder %s28, 0
      %s31 = sadd.s32 %s30, 1
      %s32 = scalar_select %p29, %s30, %s31
      %p35 = pneg %p29
      %p36 = scmp.eq.s32.totalorder %s20, 1
      %p37 = por %p35, %p36
      %p38 = scmp.ne.s32.totalorder %s30, %s33
      %p39 = scmp.eq.s32.totalorder %s20, 0
      %p40 = por %p38, %p39
      %p41 = scmp.ne.s32.totalorder %s30, %s33
      %p42 = scmp.eq.s32.totalorder %s25, 1
      %p43 = por %p41, %p42
      %p44 = scmp.ne.s32.totalorder %s33, %s34
      %p45 = scmp.eq.s32.totalorder %s25, 0
      %p46 = por %p44, %p45
      %p47 = scmp.ne.s32.totalorder %s33, %s34
      %p48 = scmp.eq.s32.totalorder %s26, 1
      %p49 = por %p47, %p48
      %p51 = scmp.ne.s32.totalorder %s34, %s50
      %p52 = scmp.eq.s32.totalorder %s26, 0
      %p53 = por %p51, %p52
      %s54 = ssub.s32 %s20, %s27
      %p55 = scmp.eq.s32.totalorder %s54, 0
      %s57 = sadd.s32 %s56, 1
      %s58 = scalar_select %p55, %s56, %s57
      %p61 = pneg %p55
      %p62 = scmp.eq.s32.totalorder %s20, 1
      %p63 = por %p61, %p62
      %p64 = scmp.ne.s32.totalorder %s56, %s59
      %p65 = scmp.eq.s32.totalorder %s20, 0
      %p66 = por %p64, %p65
      %p67 = scmp.ne.s32.totalorder %s56, %s59
      %p68 = scmp.eq.s32.totalorder %s25, 1
      %p69 = por %p67, %p68
      %p70 = scmp.ne.s32.totalorder %s59, %s60
      %p71 = scmp.eq.s32.totalorder %s25, 0
      %p72 = por %p70, %p71
      %p73 = scmp.ne.s32.totalorder %s59, %s60
      %p74 = scmp.eq.s32.totalorder %s26, 1
      %p75 = por %p73, %p74
      %p77 = scmp.ne.s32.totalorder %s60, %s76
      %p78 = scmp.eq.s32.totalorder %s26, 0
      %p79 = por %p77, %p78
      %s80 = ssub.s32 %s20, %s27
      %p81 = scmp.eq.s32.totalorder %s80, 0
      %s83 = sadd.s32 %s82, 1
      %s84 = scalar_select %p81, %s82, %s83
      %p87 = pneg %p81
      %p88 = scmp.eq.s32.totalorder %s20, 1
      %p89 = por %p87, %p88
      %p90 = scmp.ne.s32.totalorder %s82, %s85
      %p91 = scmp.eq.s32.totalorder %s20, 0
      %p92 = por %p90, %p91
      %p93 = scmp.ne.s32.totalorder %s82, %s85
      %p94 = scmp.eq.s32.totalorder %s25, 1
      %p95 = por %p93, %p94
      %p96 = scmp.ne.s32.totalorder %s85, %s86
      %p97 = scmp.eq.s32.totalorder %s25, 0
      %p98 = por %p96, %p97
      %p99 = scmp.ne.s32.totalorder %s85, %s86
      %p100 = scmp.eq.s32.totalorder %s26, 1
      %p101 = por %p99, %p100
      %p103 = scmp.ne.s32.totalorder %s86, %s102
      %p104 = scmp.eq.s32.totalorder %s26, 0
      %p105 = por %p103, %p104
      %s106 = ssub.s32 %s20, %s27
      %p107 = scmp.eq.s32.totalorder %s106, 0
      %s109 = sadd.s32 %s108, 1
      %s110 = scalar_select %p107, %s108, %s109
      %p113 = pneg %p107
      %p114 = scmp.eq.s32.totalorder %s20, 1
      %p115 = por %p113, %p114
      %p116 = scmp.ne.s32.totalorder %s108, %s111
      %p117 = scmp.eq.s32.totalorder %s20, 0
      %p118 = por %p116, %p117
      %p119 = scmp.ne.s32.totalorder %s108, %s111
      %p120 = scmp.eq.s32.totalorder %s25, 1
      %p121 = por %p119, %p120
      %p122 = scmp.ne.s32.totalorder %s111, %s112
      %p123 = scmp.eq.s32.totalorder %s25, 0
      %p124 = por %p122, %p123
      %p125 = scmp.ne.s32.totalorder %s111, %s112
      %p126 = scmp.eq.s32.totalorder %s26, 1
      %p127 = por %p125, %p126
      %p129 = scmp.ne.s32.totalorder %s112, %s128
      %p130 = scmp.eq.s32.totalorder %s26, 0
      %p131 = por %p129, %p130
      %s132 = ssub.s32 %s20, %s27
      %p133 = scmp.eq.s32.totalorder %s132, 0
      %s135 = sadd.s32 %s134, 1
      %s136 = scalar_select %p133, %s134, %s135
      %p139 = pneg %p133
      %p140 = scmp.eq.s32.totalorder %s20, 1
      %p141 = por %p139, %p140
      %p142 = scmp.ne.s32.totalorder %s134, %s137
      %p143 = scmp.eq.s32.totalorder %s20, 0
      %p144 = por %p142, %p143
      %p145 = scmp.ne.s32.totalorder %s134, %s137
      %p146 = scmp.eq.s32.totalorder %s25, 1
      %p147 = por %p145, %p146
      %p148 = scmp.ne.s32.totalorder %s137, %s138
      %p149 = scmp.eq.s32.totalorder %s25, 0
      %p150 = por %p148, %p149
      %p151 = scmp.ne.s32.totalorder %s137, %s138
      %p152 = scmp.eq.s32.totalorder %s26, 1
      %p153 = por %p151, %p152
      %p155 = scmp.ne.s32.totalorder %s138, %s154
      %p156 = scmp.eq.s32.totalorder %s26, 0
      %p157 = por %p155, %p156
      %p158 = scmp.le.s32.totalorder 1, %s20
      %p159 = scmp.lt.s32.totalorder %s20, 3
      %p160 = pnand %p158, %p159
      %p161 = pneg %p160
      // Predicated region
      $region9: #{tpu_custom_call.1} parent=5 // pred_check
        _
      $region10: #{tpu_custom_call.1} parent=5 // pred_check_branch
        %163 = sbr.rel (%p160) target = $region12
      $region11: #{tpu_custom_call.1} parent=5 // pred_region
        %s164 = ssub.s32 %s20, 1
      $region12: #{tpu_custom_call.1} parent=5 // pred_fallthru
        _
      %p165 = scmp.lt.s32.totalorder %s20, 2
      // Predicated region
      $region13: #{tpu_custom_call.1} parent=5 // pred_check
        %p166 = pneg %p165
      $region14: #{tpu_custom_call.1} parent=5 // pred_check_branch
        %168 = sbr.rel (%p166) target = $region16
      $region15: #{tpu_custom_call.1} parent=5 // pred_region
        // Predicated region
        $region17: #{tpu_custom_call.1} parent=15 // pred_check
          %p169 = pneg %p40
        $region18: #{tpu_custom_call.1} parent=15 // pred_check_branch
          %171 = sbr.rel (%p169) target = $region20
        $region19: #{tpu_custom_call.1} parent=15 // pred_region
          %s172 = smul.u32 8, %s20
          %p173 = scmp.lt.s32.totalorder %s172, 15
          %s174 = scalar_select %p173, %s172, 15
          %s175 = smul.addr %s174, 2
          %s176 = smul.addr %s175, 8
          %s177 = scalar_lea.vmem %s0, %s176
          %s178 = smul.u32 8, %s20
        $region20: #{tpu_custom_call.1} parent=15 // pred_fallthru
          _
        // Predicated region
        $region21: #{tpu_custom_call.1} parent=15 // pred_check
          %p179 = pneg %p66
        $region22: #{tpu_custom_call.1} parent=15 // pred_check_branch
          %181 = sbr.rel (%p179) target = $region24
        $region23: #{tpu_custom_call.1} parent=15 // pred_region
          %s182 = sand.u32 %s56, 1
          %s183 = scalar_lea.sflag [#allocation3], %s182
          %s184 = sand.u32 %s56, 1
          %s185 = smul.addr %s184, 8
          %s186 = scalar_lea.vmem [#allocation2], %s185
          %s188 = ssub.s32 128, 128
          %189 = vsyncadd %s183, %s188
          %s190 = smul.addr %s20, 128
          %s191 = scalar_lea.hbm %s1, %s190
          %s193 = sshll.u32 %s186, 4
          %s194 = int_to_ptr.vmem [resolvable:$true] %s193
          %196 = dma.hbm_to_vmem [thread:$0]  %s191, 128, %s194, %s183
        $region24: #{tpu_custom_call.1} parent=15 // pred_fallthru
          _
        // Predicated region
        $region25: #{tpu_custom_call.1} parent=15 // pred_check
          %p197 = pneg %p92
        $region26: #{tpu_custom_call.1} parent=15 // pred_check_branch
          %199 = sbr.rel (%p197) target = $region28
        $region27: #{tpu_custom_call.1} parent=15 // pred_region
          %s200 = smul.u32 8, %s20
          %s201 = ssub.s32 17, %s200
          %p202 = scmp.lt.s32.totalorder %s201, 8
          %s203 = scalar_select %p202, %s201, 8
          %s204 = smul.u32 128, %s203
          %s205 = smul.u32 %s204, 2
          %p206 = scmp.lt.s32.totalorder %s200, 16
          %s207 = scalar_select %p206, %s200, 16
          %s208 = smul.addr %s207, 2
          %s209 = smul.addr %s208, 8
          %s210 = scalar_lea.vmem %s2, %s209
          %s211 = smul.u32 8, %s20
          %s212 = ssub.s32 17, %s211
          %p213 = scmp.lt.s32.totalorder %s212, 8
          %s214 = scalar_select %p213, %s212, 8
          %s215 = smul.u32 128, %s214
          %s216 = smul.u32 %s215, 2
        $region28: #{tpu_custom_call.1} parent=15 // pred_fallthru
          _
      $region16: #{tpu_custom_call.1} parent=5 // pred_fallthru
        _
      %p217 = scmp.le.s32.totalorder 1, %s20
      %p218 = scmp.lt.s32.totalorder %s20, 3
      %p219 = pnand %p217, %p218
      %p220 = pneg %p219
      // Predicated region
      $region29: #{tpu_custom_call.1} parent=5 // pred_check
        _
      $region30: #{tpu_custom_call.1} parent=5 // pred_check_branch
        %222 = sbr.rel (%p219) target = $region32
      $region31: #{tpu_custom_call.1} parent=5 // pred_region
        %s223 = ssub.s32 %s20, 1
        %s224 = sand.u32 %s59, 1
        %s225 = scalar_lea.sflag [#allocation3], %s224
        %s226 = sand.u32 %s59, 1
        %s227 = smul.addr %s226, 8
        %s228 = scalar_lea.vmem [#allocation2], %s227
        // Predicated region
        $region33: #{tpu_custom_call.1} parent=31 // pred_check
          %p229 = pneg %p72
        $region34: #{tpu_custom_call.1} parent=31 // pred_check_branch
          %231 = sbr.rel (%p229) target = $region36
        $region35: #{tpu_custom_call.1} parent=31 // pred_region
          %232 = dma.done %s225, 128
        $region36: #{tpu_custom_call.1} parent=31 // pred_fallthru
          _
        %s233 = smul.u32 8, %s25
        %p234 = scmp.lt.s32.totalorder %s233, 15
        %s235 = scalar_select %p234, %s233, 15
        %s236 = smul.addr %s235, 2
        %s237 = smul.addr %s236, 8
        %s238 = scalar_lea.vmem %s0, %s237
        %p239 = pneg %p46
        %p240 = pneg %p43
        %s241 = sand.u32 %s59, 1
        %s242 = scalar_lea.sflag [#allocation3], %s241
        %s243 = sand.u32 %s59, 1
        %s244 = smul.addr %s243, 8
        %s245 = scalar_lea.vmem [#allocation2], %s244
        %p246 = pneg %p72
        %p247 = pneg %p69
        %s248 = smul.u32 8, %s25
        %s249 = ssub.s32 17, %s248
        %p250 = scmp.lt.s32.totalorder %s249, 8
        %s251 = scalar_select %p250, %s249, 8
        %s252 = smul.u32 128, %s251
        %s253 = smul.u32 %s252, 2
        %p254 = scmp.lt.s32.totalorder %s248, 16
        %s255 = scalar_select %p254, %s248, 16
        %s256 = smul.addr %s255, 2
        %s257 = smul.addr %s256, 8
        %s258 = scalar_lea.vmem %s2, %s257
        %p259 = pneg %p98
        %p260 = pneg %p95
        %p261 = pneg %p124
        %p262 = pneg %p121
        %s263 = sand.u32 %s111, 1
        %s264 = scalar_lea.sflag [#allocation4], %s263
        %s265 = sand.u32 %s111, 1
        %s266 = smul.addr %s265, 8
        %s267 = scalar_lea.vmem [#allocation5], %s266
        %p268 = pneg %p150
        %p269 = pneg %p147
        %s270 = sand.u32 %s137, 1
        %s271 = scalar_lea.sflag [#allocation7], %s270
        %s272 = sand.u32 %s137, 1
        %s273 = smul.addr %s272, 8
        %s274 = scalar_lea.vmem [#allocation6], %s273
        %s275 = smul.u32 8, %s25
        %p276 = scmp.lt.s32.totalorder %s275, 15
        %s277 = scalar_select %p276, %s275, 15
        %s278 = smul.addr %s277, 2
        %s279 = smul.addr %s278, 8
        %s280 = scalar_lea.vmem %s0, %s279
        %s281 = smul.u32 8, %s25
        %s282 = smul.u32 8, %s25
        %s283 = ssub.s32 17, %s282
        %p284 = scmp.lt.s32.totalorder %s283, 8
        %s285 = scalar_select %p284, %s283, 8
        %s286 = smul.u32 128, %s285
        %s287 = smul.u32 %s286, 2
        %p288 = scmp.lt.s32.totalorder %s282, 16
        %s289 = scalar_select %p288, %s282, 16
        %s290 = smul.addr %s289, 2
        %s291 = smul.addr %s290, 8
        %s292 = scalar_lea.vmem %s2, %s291
        %s293 = smul.u32 8, %s25
        %s294 = ssub.s32 17, %s293
        %p295 = scmp.lt.s32.totalorder %s294, 8
        %s296 = scalar_select %p295, %s294, 8
        %s297 = smul.u32 128, %s296
        %s298 = smul.u32 %s297, 2
        %v299 = vld [vmem:[%s292] sm:$0xff]
        %v300 = vld [vmem:[%s292 + $0x8] sm:$0xff]
        %v301 = vld [vmem:[%s292 + $0x10] sm:$0xff]
        %v302 = vld [vmem:[%s292 + $0x18] sm:$0xff]
        %v303 = vld [vmem:[%s292 + $0x20] sm:$0xff]
        %v304 = vld [vmem:[%s292 + $0x28] sm:$0xff]
        %v305 = vld [vmem:[%s292 + $0x30] sm:$0xff]
        %v306 = vld [vmem:[%s292 + $0x38] sm:$0xff]
        %v307 = vld [vmem:[%s292 + $0x40] sm:$0xff]
        %v308 = vld [vmem:[%s292 + $0x48] sm:$0xff]
        %v309 = vld [vmem:[%s292 + $0x50] sm:$0xff]
        %v310 = vld [vmem:[%s292 + $0x58] sm:$0xff]
        %v311 = vld [vmem:[%s292 + $0x60] sm:$0xff]
        %v312 = vld [vmem:[%s292 + $0x68] sm:$0xff]
        %v313 = vld [vmem:[%s292 + $0x70] sm:$0xff]
        %v314 = vld [vmem:[%s292 + $0x78] sm:$0xff]
        %v315 = vmul.f32 %v299, %v299
        %v316 = vmul.f32 %v300, %v300
        %v317 = vmul.f32 %v301, %v301
        %v318 = vmul.f32 %v302, %v302
        %v319 = vmul.f32 %v303, %v303
        %v320 = vmul.f32 %v304, %v304
        %v321 = vmul.f32 %v305, %v305
        %v322 = vmul.f32 %v306, %v306
        %v323 = vmul.f32 %v307, %v307
        %v324 = vmul.f32 %v308, %v308
        %v325 = vmul.f32 %v309, %v309
        %v326 = vmul.f32 %v310, %v310
        %v327 = vmul.f32 %v311, %v311
        %v328 = vmul.f32 %v312, %v312
        %v329 = vmul.f32 %v313, %v313
        %v330 = vmul.f32 %v314, %v314
        %331 = vadd.xlane.f32.xlu0 %v315
        %v332 = vpop.xlane.xlu0 %331
        %333 = vadd.xlane.f32.xlu0 %v316
        %v334 = vpop.xlane.xlu0 %333
        %335 = vadd.xlane.f32.xlu0 %v317
        %v336 = vpop.xlane.xlu0 %335
        %337 = vadd.xlane.f32.xlu0 %v318
        %v338 = vpop.xlane.xlu0 %337
        %339 = vadd.xlane.f32.xlu0 %v319
        %v340 = vpop.xlane.xlu0 %339
        %341 = vadd.xlane.f32.xlu0 %v320
        %v342 = vpop.xlane.xlu0 %341
        %343 = vadd.xlane.f32.xlu0 %v321
        %v344 = vpop.xlane.xlu0 %343
        %345 = vadd.xlane.f32.xlu0 %v322
        %v346 = vpop.xlane.xlu0 %345
        %347 = vadd.xlane.f32.xlu0 %v323
        %v348 = vpop.xlane.xlu0 %347
        %349 = vadd.xlane.f32.xlu0 %v324
        %v350 = vpop.xlane.xlu0 %349
        %351 = vadd.xlane.f32.xlu0 %v325
        %v352 = vpop.xlane.xlu0 %351
        %353 = vadd.xlane.f32.xlu0 %v326
        %v354 = vpop.xlane.xlu0 %353
        %355 = vadd.xlane.f32.xlu0 %v327
        %v356 = vpop.xlane.xlu0 %355
        %357 = vadd.xlane.f32.xlu0 %v328
        %v358 = vpop.xlane.xlu0 %357
        %359 = vadd.xlane.f32.xlu0 %v329
        %v360 = vpop.xlane.xlu0 %359
        %361 = vadd.xlane.f32.xlu0 %v330
        %v362 = vpop.xlane.xlu0 %361
        %v363 = vmax.f32 %v332, 1e-30
        %v364 = vmax.f32 %v334, 1e-30
        %v365 = vmax.f32 %v336, 1e-30
        %v366 = vmax.f32 %v338, 1e-30
        %v367 = vmax.f32 %v340, 1e-30
        %v368 = vmax.f32 %v342, 1e-30
        %v369 = vmax.f32 %v344, 1e-30
        %v370 = vmax.f32 %v346, 1e-30
        %v371 = vmax.f32 %v348, 1e-30
        %v372 = vmax.f32 %v350, 1e-30
        %v373 = vmax.f32 %v352, 1e-30
        %v374 = vmax.f32 %v354, 1e-30
        %v375 = vmax.f32 %v356, 1e-30
        %v376 = vmax.f32 %v358, 1e-30
        %v377 = vmax.f32 %v360, 1e-30
        %v378 = vmax.f32 %v362, 1e-30
        %v379 = vrsqrt.pop %v363
        %v380 = vrsqrt.pop %v364
        %v381 = vrsqrt.pop %v365
        %v382 = vrsqrt.pop %v366
        %v383 = vrsqrt.pop %v367
        %v384 = vrsqrt.pop %v368
        %v385 = vrsqrt.pop %v369
        %v386 = vrsqrt.pop %v370
        %v387 = vrsqrt.pop %v371
        %v388 = vrsqrt.pop %v372
        %v389 = vrsqrt.pop %v373
        %v390 = vrsqrt.pop %v374
        %v391 = vrsqrt.pop %v375
        %v392 = vrsqrt.pop %v376
        %v393 = vrsqrt.pop %v377
        %v394 = vrsqrt.pop %v378
        %v395 = vmul.f32 %v299, %v379
        %v396 = vmul.f32 %v300, %v380
        %v397 = vmul.f32 %v301, %v381
        %v398 = vmul.f32 %v302, %v382
        %v399 = vmul.f32 %v303, %v383
        %v400 = vmul.f32 %v304, %v384
        %v401 = vmul.f32 %v305, %v385
        %v402 = vmul.f32 %v306, %v386
        %v403 = vmul.f32 %v307, %v387
        %v404 = vmul.f32 %v308, %v388
        %v405 = vmul.f32 %v309, %v389
        %v406 = vmul.f32 %v310, %v390
        %v407 = vmul.f32 %v311, %v391
        %v408 = vmul.f32 %v312, %v392
        %v409 = vmul.f32 %v313, %v393
        %v410 = vmul.f32 %v314, %v394
        %v411 = vld [vmem:[%s280] sm:$0xff]
        %v412 = vld [vmem:[%s280 + $0x8] sm:$0xff]
        %v413 = vld [vmem:[%s280 + $0x10] sm:$0xff]
        %v414 = vld [vmem:[%s280 + $0x18] sm:$0xff]
        %v415 = vld [vmem:[%s280 + $0x20] sm:$0xff]
        %v416 = vld [vmem:[%s280 + $0x28] sm:$0xff]
        %v417 = vld [vmem:[%s280 + $0x30] sm:$0xff]
        %v418 = vld [vmem:[%s280 + $0x38] sm:$0xff]
        %v419 = vld [vmem:[%s280 + $0x40] sm:$0xff]
        %v420 = vld [vmem:[%s280 + $0x48] sm:$0xff]
        %v421 = vld [vmem:[%s280 + $0x50] sm:$0xff]
        %v422 = vld [vmem:[%s280 + $0x58] sm:$0xff]
        %v423 = vld [vmem:[%s280 + $0x60] sm:$0xff]
        %v424 = vld [vmem:[%s280 + $0x68] sm:$0xff]
        %v425 = vld [vmem:[%s280 + $0x70] sm:$0xff]
        %v426 = vld [vmem:[%s280 + $0x78] sm:$0xff]
        %v427 = vld [vmem:[%s228] sm:$0xff]
        %v428 = vmul.f32 %v427, %v427
        %429 = vadd.xlane.f32.xlu0 %v428
        %v430 = vpop.xlane.xlu0 %429
        %v431 = vmax.f32 %v430, 1e-30
        %v432 = vrsqrt.pop %v431
        %v433 = vmul.f32 %v427, %v432
        %435 = vset.pattern.permute.xlu0 0
        %436 = vperm.xlu0 %435, %v411
        %v437 = vpop.permute.xlu0 %436
        %440 = vset.pattern.permute.xlu0 0
        %441 = vperm.xlu0 %440, %v412
        %v442 = vpop.permute.xlu0 %441
        %445 = vset.pattern.permute.xlu0 0
        %446 = vperm.xlu0 %445, %v413
        %v447 = vpop.permute.xlu0 %446
        %450 = vset.pattern.permute.xlu0 0
        %451 = vperm.xlu0 %450, %v414
        %v452 = vpop.permute.xlu0 %451
        %455 = vset.pattern.permute.xlu0 0
        %456 = vperm.xlu0 %455, %v415
        %v457 = vpop.permute.xlu0 %456
        %460 = vset.pattern.permute.xlu0 0
        %461 = vperm.xlu0 %460, %v416
        %v462 = vpop.permute.xlu0 %461
        %465 = vset.pattern.permute.xlu0 0
        %466 = vperm.xlu0 %465, %v417
        %v467 = vpop.permute.xlu0 %466
        %470 = vset.pattern.permute.xlu0 0
        %471 = vperm.xlu0 %470, %v418
        %v472 = vpop.permute.xlu0 %471
        %475 = vset.pattern.permute.xlu0 0
        %476 = vperm.xlu0 %475, %v419
        %v477 = vpop.permute.xlu0 %476
        %480 = vset.pattern.permute.xlu0 0
        %481 = vperm.xlu0 %480, %v420
        %v482 = vpop.permute.xlu0 %481
        %485 = vset.pattern.permute.xlu0 0
        %486 = vperm.xlu0 %485, %v421
        %v487 = vpop.permute.xlu0 %486
        %490 = vset.pattern.permute.xlu0 0
        %491 = vperm.xlu0 %490, %v422
        %v492 = vpop.permute.xlu0 %491
        %495 = vset.pattern.permute.xlu0 0
        %496 = vperm.xlu0 %495, %v423
        %v497 = vpop.permute.xlu0 %496
        %500 = vset.pattern.permute.xlu0 0
        %501 = vperm.xlu0 %500, %v424
        %v502 = vpop.permute.xlu0 %501
        %505 = vset.pattern.permute.xlu0 0
        %506 = vperm.xlu0 %505, %v425
        %v507 = vpop.permute.xlu0 %506
        %510 = vset.pattern.permute.xlu0 0
        %511 = vperm.xlu0 %510, %v426
        %v512 = vpop.permute.xlu0 %511
        %v514 = vmul.f32 %v437, %v395
        %v515 = vmul.f32 %v442, %v396
        %v516 = vmul.f32 %v447, %v397
        %v517 = vmul.f32 %v452, %v398
        %v518 = vmul.f32 %v457, %v399
        %v519 = vmul.f32 %v462, %v400
        %v520 = vmul.f32 %v467, %v401
        %v521 = vmul.f32 %v472, %v402
        %v522 = vmul.f32 %v477, %v403
        %v523 = vmul.f32 %v482, %v404
        %v524 = vmul.f32 %v487, %v405
        %v525 = vmul.f32 %v492, %v406
        %v526 = vmul.f32 %v497, %v407
        %v527 = vmul.f32 %v502, %v408
        %v528 = vmul.f32 %v507, %v409
        %v529 = vmul.f32 %v512, %v410
        %v530 = vadd.f32 %v514, %v515
        %v531 = vrot.slane %v530, 4
        %v532 = vadd.f32 %v530, %v531
        %v533 = vrot.slane %v532, 2
        %v534 = vadd.f32 %v532, %v533
        %v535 = vrot.slane %v534, 1
        %v536 = vadd.f32 %v534, %v535
        %v537 = vadd.f32 %v516, %v517
        %v538 = vrot.slane %v537, 4
        %v539 = vadd.f32 %v537, %v538
        %v540 = vrot.slane %v539, 2
        %v541 = vadd.f32 %v539, %v540
        %v542 = vrot.slane %v541, 1
        %v543 = vadd.f32 %v541, %v542
        %v544 = vadd.f32 %v518, %v519
        %v545 = vrot.slane %v544, 4
        %v546 = vadd.f32 %v544, %v545
        %v547 = vrot.slane %v546, 2
        %v548 = vadd.f32 %v546, %v547
        %v549 = vrot.slane %v548, 1
        %v550 = vadd.f32 %v548, %v549
        %v551 = vadd.f32 %v520, %v521
        %v552 = vrot.slane %v551, 4
        %v553 = vadd.f32 %v551, %v552
        %v554 = vrot.slane %v553, 2
        %v555 = vadd.f32 %v553, %v554
        %v556 = vrot.slane %v555, 1
        %v557 = vadd.f32 %v555, %v556
        %v558 = vadd.f32 %v522, %v523
        %v559 = vrot.slane %v558, 4
        %v560 = vadd.f32 %v558, %v559
        %v561 = vrot.slane %v560, 2
        %v562 = vadd.f32 %v560, %v561
        %v563 = vrot.slane %v562, 1
        %v564 = vadd.f32 %v562, %v563
        %v565 = vadd.f32 %v524, %v525
        %v566 = vrot.slane %v565, 4
        %v567 = vadd.f32 %v565, %v566
        %v568 = vrot.slane %v567, 2
        %v569 = vadd.f32 %v567, %v568
        %v570 = vrot.slane %v569, 1
        %v571 = vadd.f32 %v569, %v570
        %v572 = vadd.f32 %v526, %v527
        %v573 = vrot.slane %v572, 4
        %v574 = vadd.f32 %v572, %v573
        %v575 = vrot.slane %v574, 2
        %v576 = vadd.f32 %v574, %v575
        %v577 = vrot.slane %v576, 1
        %v578 = vadd.f32 %v576, %v577
        %v579 = vadd.f32 %v528, %v529
        %v580 = vrot.slane %v579, 4
        %v581 = vadd.f32 %v579, %v580
        %v582 = vrot.slane %v581, 2
        %v583 = vadd.f32 %v581, %v582
        %v584 = vrot.slane %v583, 1
        %v585 = vadd.f32 %v583, %v584
        %vm594 = vcmask 1041409
        %v595 = vsel %vm594, %v543, %v536
        %vm596 = vcmask 1042434
        %v597 = vsel %vm596, %v550, %v595
        %vm598 = vcmask 1043459
        %v599 = vsel %vm598, %v557, %v597
        %vm600 = vcmask 1044484
        %v601 = vsel %vm600, %v564, %v599
        %vm602 = vcmask 1045509
        %v603 = vsel %vm602, %v571, %v601
        %vm604 = vcmask 1046534
        %v605 = vsel %vm604, %v578, %v603
        %vm606 = vcmask 1047559
        %v607 = vsel %vm606, %v585, %v605
        %v609 = vmul.f32 %v433, %v607
        %610 = vst [vmem:[%s267] sm:$0xff] %v609
        %611 = vst [vmem:[%s274] sm:$0xff] 0.0
        %s612 = sand.u32 %s111, 1
        %s613 = scalar_lea.sflag [#allocation4], %s612
        %s614 = sand.u32 %s111, 1
        %s615 = smul.addr %s614, 8
        %s616 = scalar_lea.vmem [#allocation5], %s615
        %s617 = sand.u32 %s137, 1
        %s618 = scalar_lea.sflag [#allocation7], %s617
        %s619 = sand.u32 %s137, 1
        %s620 = smul.addr %s619, 8
        %s621 = scalar_lea.vmem [#allocation6], %s620
        // Predicated region
        $region37: #{tpu_custom_call.1} parent=31 // pred_check
          %p622 = pneg %p121
        $region38: #{tpu_custom_call.1} parent=31 // pred_check_branch
          %624 = sbr.rel (%p622) target = $region40
        $region39: #{tpu_custom_call.1} parent=31 // pred_region
          %s626 = ssub.s32 128, 128
          %627 = vsyncadd %s613, %s626
          %s628 = smul.addr %s25, 128
          %s629 = scalar_lea.hbm %s3, %s628
          %s631 = sshll.u32 %s616, 4
          %s632 = int_to_ptr.vmem [resolvable:$true] %s631
          %634 = dma.vmem_to_hbm [thread:$0]  %s632, 128, %s629, %s613
        $region40: #{tpu_custom_call.1} parent=31 // pred_fallthru
          _
        // Predicated region
        $region41: #{tpu_custom_call.1} parent=31 // pred_check
          %p635 = pneg %p147
        $region42: #{tpu_custom_call.1} parent=31 // pred_check_branch
          %637 = sbr.rel (%p635) target = $region44
        $region43: #{tpu_custom_call.1} parent=31 // pred_region
          %s639 = ssub.s32 128, 128
          %640 = vsyncadd %s618, %s639
          %s641 = smul.addr %s25, 128
          %s642 = scalar_lea.hbm %s4, %s641
          %s644 = sshll.u32 %s621, 4
          %s645 = int_to_ptr.vmem [resolvable:$true] %s644
          %647 = dma.vmem_to_hbm [thread:$0]  %s645, 128, %s642, %s618
        $region44: #{tpu_custom_call.1} parent=31 // pred_fallthru
          _
      $region32: #{tpu_custom_call.1} parent=5 // pred_fallthru
        _
      %p648 = scmp.le.s32.totalorder 2, %s20
      // Predicated region
      $region45: #{tpu_custom_call.1} parent=5 // pred_check
        %p649 = pneg %p648
      $region46: #{tpu_custom_call.1} parent=5 // pred_check_branch
        %651 = sbr.rel (%p649) target = $region48
      $region47: #{tpu_custom_call.1} parent=5 // pred_region
        %s652 = ssub.s32 %s20, 2
        // Predicated region
        $region49: #{tpu_custom_call.1} parent=47 // pred_check
          %p653 = pneg %p127
        $region50: #{tpu_custom_call.1} parent=47 // pred_check_branch
          %655 = sbr.rel (%p653) target = $region52
        $region51: #{tpu_custom_call.1} parent=47 // pred_region
          %s656 = sand.u32 %s112, 1
          %s657 = scalar_lea.sflag [#allocation4], %s656
          %s658 = sand.u32 %s112, 1
          %s659 = smul.addr %s658, 8
          %s660 = scalar_lea.vmem [#allocation5], %s659
          %661 = dma.done %s657, 128
        $region52: #{tpu_custom_call.1} parent=47 // pred_fallthru
          _
        // Predicated region
        $region53: #{tpu_custom_call.1} parent=47 // pred_check
          %p662 = pneg %p153
        $region54: #{tpu_custom_call.1} parent=47 // pred_check_branch
          %664 = sbr.rel (%p662) target = $region56
        $region55: #{tpu_custom_call.1} parent=47 // pred_region
          %s665 = sand.u32 %s138, 1
          %s666 = scalar_lea.sflag [#allocation7], %s665
          %s667 = sand.u32 %s138, 1
          %s668 = smul.addr %s667, 8
          %s669 = scalar_lea.vmem [#allocation6], %s668
          %670 = dma.done %s666, 128
        $region56: #{tpu_custom_call.1} parent=47 // pred_fallthru
          _
      $region48: #{tpu_custom_call.1} parent=5 // pred_fallthru
        _
    $region6: #{tpu_custom_call.1} parent=1 // loop_footer
      %s24 = sadd.s32 1, %s20
    $region7: #{tpu_custom_call.1} parent=1 // loop_footer_branch
      %19 = sbr.rel target = $region3
    $region8: #{tpu_custom_call.1} parent=1 // loop_exit
      _
    %671 = vsyncpa [#allocation3], 1
    %s672 = scalar_lea.sflag [#allocation3], 1
    %673 = vsyncpa %s672, 1
    %674 = vsyncpa [#allocation4], 1
    %s675 = scalar_lea.sflag [#allocation4], 1
    %676 = vsyncpa %s675, 1
    %677 = vsyncpa [#allocation7], 1
    %s678 = scalar_lea.sflag [#allocation7], 1
    %679 = vsyncpa %s678, 1

</llo_original>
